<compile_context>
chip_gen: v5e
topology: v5e:2x2
jax: 0.10.0
libtpu: 0.0.40
codegen_flags: <defaults>
</compile_context>

<pallas_src>
import functools

import jax
import jax.numpy as jnp
from jax.experimental import pallas as pl
from jax.experimental.pallas import tpu as pltpu

LANE = 128  # vreg lane width


def _round_up(n, m):
    return ((n + m - 1) // m) * m


def actor_mlp_kernel(x_ref, w1_ref, b1_ref, w2_ref, b2_ref, w3_ref, b3_ref, out_ref):
    # x: (TB, S) f32 (streamed);  w*: bf16, feature dims lane-padded;
    # b*: (1, *_pad) f32;  out: (TB, A_pad) f32 (lane-dense store).
    x = x_ref[...].astype(jnp.bfloat16)  # VPU cast, keeps the HBM stream at f32/unpadded
    # Layer 1: MXU matmul (bf16 operands, f32 acc), bias + tanh in f32.
    h1 = jnp.dot(x, w1_ref[...], preferred_element_type=jnp.float32) + b1_ref[...]
    h1 = jnp.tanh(h1).astype(jnp.bfloat16)
    # Layer 2
    h2 = jnp.dot(h1, w2_ref[...], preferred_element_type=jnp.float32) + b2_ref[...]
    h2 = jnp.tanh(h2).astype(jnp.bfloat16)
    # Layer 3 (logits) — (TB, 128) full-width store.
    out_ref[...] = jnp.dot(h2, w3_ref[...], preferred_element_type=jnp.float32) + b3_ref[...]


@functools.partial(jax.jit, static_argnames=("action_dim", "block_b"))
def actor_forward(x, padded_params, *, action_dim, block_b=256):
    """Actor.forward(x) for a (B, state_dim) f32 batch. Returns (B, action_dim) f32 logits.

    `padded_params` must come from `prepare_actor_params` (hidden/output dims padded
    to 128 lanes, weights in bf16, biases in f32).
    """
    w1, b1, w2, b2, w3, b3 = padded_params
    B, S = x.shape
    H_pad = w1.shape[1]
    A_pad = w3.shape[1]

    # Batch tile: multiple of 8 sublanes; pad B only if the grid doesn't divide evenly.
    TB = min(block_b, _round_up(B, 8))
    B_pad = _round_up(B, TB)
    xp = x if B_pad == B else jnp.pad(x, ((0, B_pad - B), (0, 0)))

    # Constant block index across the batch grid -> fetched once, VMEM-resident.
    resident = lambda shape: pl.BlockSpec(shape, lambda i: (0, 0))

    out = pl.pallas_call(
        actor_mlp_kernel,
        out_shape=jax.ShapeDtypeStruct((B_pad, A_pad), jnp.float32),
        grid=(B_pad // TB,),
        in_specs=[
            pl.BlockSpec((TB, S), lambda i: (i, 0)),  # streamed, double-buffered
            resident((S, H_pad)),
            resident((1, H_pad)),
            resident((H_pad, H_pad)),
            resident((1, H_pad)),
            resident((H_pad, A_pad)),
            resident((1, A_pad)),
        ],
        out_specs=pl.BlockSpec((TB, A_pad), lambda i: (i, 0)),
        compiler_params=pltpu.CompilerParams(
            # Batch tiles are independent -> shard across v7x's 2 TensorCores.
            dimension_semantics=("parallel",),
        ),
    )(xp, w1, b1, w2, b2, w3, b3)

    # Strip batch padding and the lane padding of the action dim.
    return out[:B, :action_dim]


def init_actor_params(key, state_dim, action_dim, hidden_size=64):
    """Torch-nn.Linear-style init; weights stored transposed as (in, out)."""
    ks = jax.random.split(key, 6)

    def lin(kw, kb, fan_in, fan_out):
        bound = 1.0 / jnp.sqrt(jnp.float32(fan_in))
        w = jax.random.uniform(kw, (fan_in, fan_out), jnp.float32, -bound, bound)
        b = jax.random.uniform(kb, (fan_out,), jnp.float32, -bound, bound)
        return w, b

    w1, b1 = lin(ks[0], ks[1], state_dim, hidden_size)
    w2, b2 = lin(ks[2], ks[3], hidden_size, hidden_size)
    w3, b3 = lin(ks[4], ks[5], hidden_size, action_dim)
    # The module's nn.Parameter log_std is not used by forward(); only by get_dist().
    return (w1, b1, w2, b2, w3, b3)


def prepare_actor_params(params):
    """One-time prep: zero-pad hidden/output dims to multiples of 128, cast weights to bf16.

    The input (state) dim of w1 is left unpadded so x can be streamed without a padding
    copy. Zero padding is exact: padded hidden units are tanh(0)=0 and contribute 0 to
    every downstream dot; padded output columns are sliced off in the wrapper.
    """
    w1, b1, w2, b2, w3, b3 = params
    S, H = w1.shape
    A = w3.shape[1]
    H_pad = _round_up(H, LANE)
    A_pad = _round_up(A, LANE)

    def pad_w(w, rows, cols):
        out = jnp.zeros((rows, cols), jnp.bfloat16)
        return out.at[: w.shape[0], : w.shape[1]].set(w.astype(jnp.bfloat16))

    def pad_b(b, cols):
        out = jnp.zeros((1, cols), jnp.float32)
        return out.at[0, : b.shape[0]].set(b)

    return (
        pad_w(w1, S, H_pad), pad_b(b1, H_pad),
        pad_w(w2, H_pad, H_pad), pad_b(b2, H_pad),
        pad_w(w3, H_pad, A_pad), pad_b(b3, A_pad),
    )


def _check(x, padded_params, params, action_dim, block_b=256):
    logits = jax.block_until_ready(
        actor_forward(x, padded_params, action_dim=action_dim, block_b=block_b)
    )
    B = x.shape[0]
    assert logits.shape == (B, action_dim)

    # Reference 1: pure-JAX with the SAME bf16-operand / f32-accumulate math.
    w1p, b1p, w2p, b2p, w3p, b3p = padded_params
    xb = x.astype(jnp.bfloat16)
    r = jnp.tanh(jnp.dot(xb, w1p, preferred_element_type=jnp.float32) + b1p).astype(jnp.bfloat16)
    r = jnp.tanh(jnp.dot(r, w2p, preferred_element_type=jnp.float32) + b2p).astype(jnp.bfloat16)
    ref_bf16 = (jnp.dot(r, w3p, preferred_element_type=jnp.float32) + b3p)[:, :action_dim]
    assert jnp.allclose(logits, ref_bf16, atol=2e-3, rtol=2e-3), "mismatch vs bf16 JAX reference"

    # Reference 2: full-f32 PyTorch-equivalent math (loose tol: bf16 matmul operands).
    w1, b1, w2, b2, w3, b3 = params
    ref_f32 = jnp.tanh(x @ w1 + b1)
    ref_f32 = jnp.tanh(ref_f32 @ w2 + b2)
    ref_f32 = ref_f32 @ w3 + b3
    assert jnp.allclose(logits, ref_f32, atol=5e-2), "mismatch vs f32 reference"
    return logits


if __name__ == "__main__":
    key = jax.random.PRNGKey(0)
    k_x, k_x2, k_p = jax.random.split(key, 3)

    # RL actor: small feature dims, but a rollout chunk per call so the kernel
    # amortizes launch/DMA overhead.
    B, STATE_DIM, ACTION_DIM, HIDDEN = 512, 16, 4, 64

    params = init_actor_params(k_p, STATE_DIM, ACTION_DIM, HIDDEN)
    padded_params = prepare_actor_params(params)

    # Case 1: rollout-sized batch (divides evenly into tiles, 2 grid steps).
    x = jax.random.normal(k_x, (B, STATE_DIM), jnp.float32)
    _check(x, padded_params, params, ACTION_DIM, block_b=256)

    # Case 2: ragged small batch (exercises the batch-padding path, single tile).
    x_small = jax.random.normal(k_x2, (37, STATE_DIM), jnp.float32)
    _check(x_small, padded_params, params, ACTION_DIM, block_b=256)

    # TODO(synk): get_dist()/commit_action() (Normal sampling with exp(log_std)) are
    # distribution utilities outside forward(); not implemented as a kernel.
    print("KERNEL_OK")
</pallas_src>

<mosaic_0001>
module attributes {stable_mosaic.version = 11 : i64} {
  func.func @actor_mlp_kernel(%arg0: i32, %arg1: memref<256x16xf32, #tpu.memory_space<vmem>>, %arg2: memref<16x128xbf16, #tpu.memory_space<vmem>>, %arg3: memref<1x128xf32, #tpu.memory_space<vmem>>, %arg4: memref<128x128xbf16, #tpu.memory_space<vmem>>, %arg5: memref<1x128xf32, #tpu.memory_space<vmem>>, %arg6: memref<128x128xbf16, #tpu.memory_space<vmem>>, %arg7: memref<1x128xf32, #tpu.memory_space<vmem>>, %arg8: memref<256x128xf32, #tpu.memory_space<vmem>>) attributes {dimension_semantics = [#tpu.dimension_semantics<parallel>], iteration_bounds = array<i64: 2>, scalar_prefetch = 0 : i64, scratch_operands = 0 : i64, tpu.core_type = #tpu.core_type<tc>, window_params = [{transform_indices = @transform_0, window_bounds = array<i64: 256, 16>}, {pipeline_mode = #tpu.pipeline_mode<synchronous>, transform_indices = @transform_1, window_bounds = array<i64: 16, 128>}, {pipeline_mode = #tpu.pipeline_mode<synchronous>, transform_indices = @transform_2, window_bounds = array<i64: 1, 128>}, {pipeline_mode = #tpu.pipeline_mode<synchronous>, transform_indices = @transform_3, window_bounds = array<i64: 128, 128>}, {pipeline_mode = #tpu.pipeline_mode<synchronous>, transform_indices = @transform_4, window_bounds = array<i64: 1, 128>}, {pipeline_mode = #tpu.pipeline_mode<synchronous>, transform_indices = @transform_5, window_bounds = array<i64: 128, 128>}, {pipeline_mode = #tpu.pipeline_mode<synchronous>, transform_indices = @transform_6, window_bounds = array<i64: 1, 128>}, {transform_indices = @transform_7, window_bounds = array<i64: 256, 128>}]} {
    %c0 = arith.constant 0 : index
    %c0_0 = arith.constant 0 : index
    %0 = vector.load %arg1[%c0, %c0_0] : memref<256x16xf32, #tpu.memory_space<vmem>>, vector<256x16xf32>
    %1 = arith.truncf %0 : vector<256x16xf32> to vector<256x16xbf16>
    %c0_1 = arith.constant 0 : index
    %c0_2 = arith.constant 0 : index
    %2 = vector.load %arg2[%c0_1, %c0_2] : memref<16x128xbf16, #tpu.memory_space<vmem>>, vector<16x128xbf16>
    %cst = arith.constant dense<0.000000e+00> : vector<256x128xf32>
    %3 = tpu.matmul %1, %2, %cst {dimension_numbers = #tpu.dot_dimension_numbers<[1], [0], [0], [1], [0, 0, 1, 1], [], []>} : vector<256x16xbf16>, vector<16x128xbf16>, vector<256x128xf32> -> vector<256x128xf32>
    %c0_3 = arith.constant 0 : index
    %c0_4 = arith.constant 0 : index
    %4 = vector.load %arg3[%c0_3, %c0_4] : memref<1x128xf32, #tpu.memory_space<vmem>>, vector<1x128xf32>
    %5 = vector.broadcast %4 : vector<1x128xf32> to vector<256x128xf32>
    %6 = arith.addf %3, %5 : vector<256x128xf32>
    %7 = math.tanh %6 : vector<256x128xf32>
    %8 = arith.truncf %7 : vector<256x128xf32> to vector<256x128xbf16>
    %c0_5 = arith.constant 0 : index
    %c0_6 = arith.constant 0 : index
    %9 = vector.load %arg4[%c0_5, %c0_6] : memref<128x128xbf16, #tpu.memory_space<vmem>>, vector<128x128xbf16>
    %cst_7 = arith.constant dense<0.000000e+00> : vector<256x128xf32>
    %10 = tpu.matmul %8, %9, %cst_7 {dimension_numbers = #tpu.dot_dimension_numbers<[1], [0], [0], [1], [0, 0, 1, 1], [], []>} : vector<256x128xbf16>, vector<128x128xbf16>, vector<256x128xf32> -> vector<256x128xf32>
    %c0_8 = arith.constant 0 : index
    %c0_9 = arith.constant 0 : index
    %11 = vector.load %arg5[%c0_8, %c0_9] : memref<1x128xf32, #tpu.memory_space<vmem>>, vector<1x128xf32>
    %12 = vector.broadcast %11 : vector<1x128xf32> to vector<256x128xf32>
    %13 = arith.addf %10, %12 : vector<256x128xf32>
    %14 = math.tanh %13 : vector<256x128xf32>
    %15 = arith.truncf %14 : vector<256x128xf32> to vector<256x128xbf16>
    %c0_10 = arith.constant 0 : index
    %c0_11 = arith.constant 0 : index
    %16 = vector.load %arg6[%c0_10, %c0_11] : memref<128x128xbf16, #tpu.memory_space<vmem>>, vector<128x128xbf16>
    %cst_12 = arith.constant dense<0.000000e+00> : vector<256x128xf32>
    %17 = tpu.matmul %15, %16, %cst_12 {dimension_numbers = #tpu.dot_dimension_numbers<[1], [0], [0], [1], [0, 0, 1, 1], [], []>} : vector<256x128xbf16>, vector<128x128xbf16>, vector<256x128xf32> -> vector<256x128xf32>
    %c0_13 = arith.constant 0 : index
    %c0_14 = arith.constant 0 : index
    %18 = vector.load %arg7[%c0_13, %c0_14] : memref<1x128xf32, #tpu.memory_space<vmem>>, vector<1x128xf32>
    %19 = vector.broadcast %18 : vector<1x128xf32> to vector<256x128xf32>
    %20 = arith.addf %17, %19 : vector<256x128xf32>
    %c0_15 = arith.constant 0 : index
    %c0_16 = arith.constant 0 : index
    %21 = vector.load %arg8[%c0_15, %c0_16] : memref<256x128xf32, #tpu.memory_space<vmem>>, vector<256x128xf32>
    tpu.vector_store %arg8[%c0_15, %c0_16], %20 {strides = array<i32>} : memref<256x128xf32, #tpu.memory_space<vmem>>, vector<256x128xf32>,
    return
  }
  func.func @transform_0(%arg0: i32) -> (i32, i32) {
    %c0_i32 = arith.constant 0 : i32
    %c0_i32_0 = arith.constant 0 : i32
    return %arg0, %c0_i32 : i32, i32
  }
  func.func @transform_1(%arg0: i32) -> (i32, i32) {
    %c0_i32 = arith.constant 0 : i32
    %c0_i32_0 = arith.constant 0 : i32
    %c0_i32_1 = arith.constant 0 : i32
    return %c0_i32, %c0_i32_0 : i32, i32
  }
  func.func @transform_2(%arg0: i32) -> (i32, i32) {
    %c0_i32 = arith.constant 0 : i32
    %c0_i32_0 = arith.constant 0 : i32
    %c0_i32_1 = arith.constant 0 : i32
    return %c0_i32, %c0_i32_0 : i32, i32
  }
  func.func @transform_3(%arg0: i32) -> (i32, i32) {
    %c0_i32 = arith.constant 0 : i32
    %c0_i32_0 = arith.constant 0 : i32
    %c0_i32_1 = arith.constant 0 : i32
    return %c0_i32, %c0_i32_0 : i32, i32
  }
  func.func @transform_4(%arg0: i32) -> (i32, i32) {
    %c0_i32 = arith.constant 0 : i32
    %c0_i32_0 = arith.constant 0 : i32
    %c0_i32_1 = arith.constant 0 : i32
    return %c0_i32, %c0_i32_0 : i32, i32
  }
  func.func @transform_5(%arg0: i32) -> (i32, i32) {
    %c0_i32 = arith.constant 0 : i32
    %c0_i32_0 = arith.constant 0 : i32
    %c0_i32_1 = arith.constant 0 : i32
    return %c0_i32, %c0_i32_0 : i32, i32
  }
  func.func @transform_6(%arg0: i32) -> (i32, i32) {
    %c0_i32 = arith.constant 0 : i32
    %c0_i32_0 = arith.constant 0 : i32
    %c0_i32_1 = arith.constant 0 : i32
    return %c0_i32, %c0_i32_0 : i32, i32
  }
  func.func @transform_7(%arg0: i32) -> (i32, i32) {
    %c0_i32 = arith.constant 0 : i32
    %c0_i32_0 = arith.constant 0 : i32
    return %arg0, %c0_i32 : i32, i32
  }
}

</mosaic_0001>

<llo_original>
// kernel: actor_forward.1
$region0: #{actor_forward.1}
  #allocation0 [shape = 'u32[]', space=smem, size = 0x4, offset = 0x4, fixed_abs, tag = 'smem constant byte address 0x4 - core index']
  #allocation1 [shape = 'u32[72,128]{1,0:T(1,128)}', space=vmem, size = 0x9000, scoped, tag = 'internal scratch']
  %s0 = inlined_call_operand.vmem [shape: f32[512,16], index: 0, kind: input, shape index: {}]
  %s1 = inlined_call_operand.vmem [shape: bf16[16,128], index: 1, kind: input, shape index: {}]
  %s2 = inlined_call_operand.vmem [shape: f32[1,128], index: 2, kind: input, shape index: {}]
  %s3 = inlined_call_operand.vmem [shape: bf16[128,128], index: 3, kind: input, shape index: {}]
  %s4 = inlined_call_operand.vmem [shape: f32[1,128], index: 4, kind: input, shape index: {}]
  %s5 = inlined_call_operand.vmem [shape: bf16[128,128], index: 5, kind: input, shape index: {}]
  %s6 = inlined_call_operand.vmem [shape: f32[1,128], index: 6, kind: input, shape index: {}]
  %s7 = inlined_call_operand.vmem [shape: f32[512,128], index: 7, kind: output, shape index: {}]
  %s8 = sld [smem:[#allocation0]]
  $region61: #{actor_forward.1} parent=0
    _
  %s10 = ssub.s32 1, %s8
  %s11 = scalar_select 0, %s10, %s8
  loop: start=0, step=1, limit=4
  $region2: #{actor_forward.1} parent=0 // loop_pre_header
    _
  $region3: #{actor_forward.1} parent=0 // loop_header
    %s13 = sphi 0, %s17
    %p14 = scmp.ge.s32.totalorder %s13, 4
    %s23 = sphi 0, %s25
    %s26 = sphi 0, %s23
    %s27 = sphi 0, %s26
    %s43 = sphi 0, %s27
    %s47 = sphi 0, %s47
    %s49 = sphi 0, %s47
    %s50 = sphi 0, %s49
    %s64 = sphi 0, %s50
    %s68 = sphi 0, %s68
    %s70 = sphi 0, %s68
    %s71 = sphi 0, %s70
    %s85 = sphi 0, %s71
    %s89 = sphi 0, %s89
    %s91 = sphi 0, %s89
    %s92 = sphi 0, %s91
    %s106 = sphi 0, %s92
    %s110 = sphi 0, %s110
    %s112 = sphi 0, %s110
    %s113 = sphi 0, %s112
    %s127 = sphi 0, %s113
    %s131 = sphi 0, %s131
    %s133 = sphi 0, %s131
    %s134 = sphi 0, %s133
    %s148 = sphi 0, %s134
    %s152 = sphi 0, %s152
    %s154 = sphi 0, %s152
    %s155 = sphi 0, %s154
    %s169 = sphi 0, %s155
    %s175 = sphi 0, %s177
    %s178 = sphi 0, %s175
    %s179 = sphi 0, %s178
    %s195 = sphi 0, %s179
  $region4: #{actor_forward.1} parent=0 // loop_header_branch
    %16 = sbr.rel (%p14) target = $region8
  $region5: #{actor_forward.1} parent=0 // loop_body
    %s18 = ssub.s32 %s13, 1
    %s19 = ssub.s32 %s13, 2
    %s20 = sadd.s32 %s13, 1
    %s21 = ssub.s32 %s13, %s20
    %p22 = scmp.eq.s32.totalorder %s21, 0
    %s24 = sadd.s32 %s23, 1
    %s25 = scalar_select %p22, %s23, %s24
    %p28 = pneg %p22
    %p29 = scmp.eq.s32.totalorder %s13, 1
    %p30 = por %p28, %p29
    %p31 = scmp.ne.s32.totalorder %s23, %s26
    %p32 = scmp.eq.s32.totalorder %s13, 0
    %p33 = por %p31, %p32
    %p34 = scmp.ne.s32.totalorder %s23, %s26
    %p35 = scmp.eq.s32.totalorder %s18, 1
    %p36 = por %p34, %p35
    %p37 = scmp.ne.s32.totalorder %s26, %s27
    %p38 = scmp.eq.s32.totalorder %s18, 0
    %p39 = por %p37, %p38
    %p40 = scmp.ne.s32.totalorder %s26, %s27
    %p41 = scmp.eq.s32.totalorder %s19, 1
    %p42 = por %p40, %p41
    %p44 = scmp.ne.s32.totalorder %s27, %s43
    %p45 = scmp.eq.s32.totalorder %s19, 0
    %p46 = por %p44, %p45
    %s48 = sadd.s32 %s47, 1
    %p51 = scmp.eq.s32.totalorder %s13, 1
    %p52 = scmp.ne.s32.totalorder %s47, %s49
    %p53 = scmp.eq.s32.totalorder %s13, 0
    %p54 = por %p52, %p53
    %p55 = scmp.ne.s32.totalorder %s47, %s49
    %p56 = scmp.eq.s32.totalorder %s18, 1
    %p57 = por %p55, %p56
    %p58 = scmp.ne.s32.totalorder %s49, %s50
    %p59 = scmp.eq.s32.totalorder %s18, 0
    %p60 = por %p58, %p59
    %p61 = scmp.ne.s32.totalorder %s49, %s50
    %p62 = scmp.eq.s32.totalorder %s19, 1
    %p63 = por %p61, %p62
    %p65 = scmp.ne.s32.totalorder %s50, %s64
    %p66 = scmp.eq.s32.totalorder %s19, 0
    %p67 = por %p65, %p66
    %s69 = sadd.s32 %s68, 1
    %p72 = scmp.eq.s32.totalorder %s13, 1
    %p73 = scmp.ne.s32.totalorder %s68, %s70
    %p74 = scmp.eq.s32.totalorder %s13, 0
    %p75 = por %p73, %p74
    %p76 = scmp.ne.s32.totalorder %s68, %s70
    %p77 = scmp.eq.s32.totalorder %s18, 1
    %p78 = por %p76, %p77
    %p79 = scmp.ne.s32.totalorder %s70, %s71
    %p80 = scmp.eq.s32.totalorder %s18, 0
    %p81 = por %p79, %p80
    %p82 = scmp.ne.s32.totalorder %s70, %s71
    %p83 = scmp.eq.s32.totalorder %s19, 1
    %p84 = por %p82, %p83
    %p86 = scmp.ne.s32.totalorder %s71, %s85
    %p87 = scmp.eq.s32.totalorder %s19, 0
    %p88 = por %p86, %p87
    %s90 = sadd.s32 %s89, 1
    %p93 = scmp.eq.s32.totalorder %s13, 1
    %p94 = scmp.ne.s32.totalorder %s89, %s91
    %p95 = scmp.eq.s32.totalorder %s13, 0
    %p96 = por %p94, %p95
    %p97 = scmp.ne.s32.totalorder %s89, %s91
    %p98 = scmp.eq.s32.totalorder %s18, 1
    %p99 = por %p97, %p98
    %p100 = scmp.ne.s32.totalorder %s91, %s92
    %p101 = scmp.eq.s32.totalorder %s18, 0
    %p102 = por %p100, %p101
    %p103 = scmp.ne.s32.totalorder %s91, %s92
    %p104 = scmp.eq.s32.totalorder %s19, 1
    %p105 = por %p103, %p104
    %p107 = scmp.ne.s32.totalorder %s92, %s106
    %p108 = scmp.eq.s32.totalorder %s19, 0
    %p109 = por %p107, %p108
    %s111 = sadd.s32 %s110, 1
    %p114 = scmp.eq.s32.totalorder %s13, 1
    %p115 = scmp.ne.s32.totalorder %s110, %s112
    %p116 = scmp.eq.s32.totalorder %s13, 0
    %p117 = por %p115, %p116
    %p118 = scmp.ne.s32.totalorder %s110, %s112
    %p119 = scmp.eq.s32.totalorder %s18, 1
    %p120 = por %p118, %p119
    %p121 = scmp.ne.s32.totalorder %s112, %s113
    %p122 = scmp.eq.s32.totalorder %s18, 0
    %p123 = por %p121, %p122
    %p124 = scmp.ne.s32.totalorder %s112, %s113
    %p125 = scmp.eq.s32.totalorder %s19, 1
    %p126 = por %p124, %p125
    %p128 = scmp.ne.s32.totalorder %s113, %s127
    %p129 = scmp.eq.s32.totalorder %s19, 0
    %p130 = por %p128, %p129
    %s132 = sadd.s32 %s131, 1
    %p135 = scmp.eq.s32.totalorder %s13, 1
    %p136 = scmp.ne.s32.totalorder %s131, %s133
    %p137 = scmp.eq.s32.totalorder %s13, 0
    %p138 = por %p136, %p137
    %p139 = scmp.ne.s32.totalorder %s131, %s133
    %p140 = scmp.eq.s32.totalorder %s18, 1
    %p141 = por %p139, %p140
    %p142 = scmp.ne.s32.totalorder %s133, %s134
    %p143 = scmp.eq.s32.totalorder %s18, 0
    %p144 = por %p142, %p143
    %p145 = scmp.ne.s32.totalorder %s133, %s134
    %p146 = scmp.eq.s32.totalorder %s19, 1
    %p147 = por %p145, %p146
    %p149 = scmp.ne.s32.totalorder %s134, %s148
    %p150 = scmp.eq.s32.totalorder %s19, 0
    %p151 = por %p149, %p150
    %s153 = sadd.s32 %s152, 1
    %p156 = scmp.eq.s32.totalorder %s13, 1
    %p157 = scmp.ne.s32.totalorder %s152, %s154
    %p158 = scmp.eq.s32.totalorder %s13, 0
    %p159 = por %p157, %p158
    %p160 = scmp.ne.s32.totalorder %s152, %s154
    %p161 = scmp.eq.s32.totalorder %s18, 1
    %p162 = por %p160, %p161
    %p163 = scmp.ne.s32.totalorder %s154, %s155
    %p164 = scmp.eq.s32.totalorder %s18, 0
    %p165 = por %p163, %p164
    %p166 = scmp.ne.s32.totalorder %s154, %s155
    %p167 = scmp.eq.s32.totalorder %s19, 1
    %p168 = por %p166, %p167
    %p170 = scmp.ne.s32.totalorder %s155, %s169
    %p171 = scmp.eq.s32.totalorder %s19, 0
    %p172 = por %p170, %p171
    %s173 = ssub.s32 %s13, %s20
    %p174 = scmp.eq.s32.totalorder %s173, 0
    %s176 = sadd.s32 %s175, 1
    %s177 = scalar_select %p174, %s175, %s176
    %p180 = pneg %p174
    %p181 = scmp.eq.s32.totalorder %s13, 1
    %p182 = por %p180, %p181
    %p183 = scmp.ne.s32.totalorder %s175, %s178
    %p184 = scmp.eq.s32.totalorder %s13, 0
    %p185 = por %p183, %p184
    %p186 = scmp.ne.s32.totalorder %s175, %s178
    %p187 = scmp.eq.s32.totalorder %s18, 1
    %p188 = por %p186, %p187
    %p189 = scmp.ne.s32.totalorder %s178, %s179
    %p190 = scmp.eq.s32.totalorder %s18, 0
    %p191 = por %p189, %p190
    %p192 = scmp.ne.s32.totalorder %s178, %s179
    %p193 = scmp.eq.s32.totalorder %s19, 1
    %p194 = por %p192, %p193
    %p196 = scmp.ne.s32.totalorder %s179, %s195
    %p197 = scmp.eq.s32.totalorder %s19, 0
    %p198 = por %p196, %p197
    %p199 = scmp.le.s32.totalorder 1, %s13
    %p200 = scmp.lt.s32.totalorder %s13, 3
    %p201 = pnand %p199, %p200
    %p202 = pneg %p201
    // Predicated region
    $region9: #{actor_forward.1} parent=5 // pred_check
      _
    $region10: #{actor_forward.1} parent=5 // pred_check_branch
      %204 = sbr.rel (%p201) target = $region12
    $region11: #{actor_forward.1} parent=5 // pred_region
      %s205 = ssub.s32 %s13, 1
      // Predicated region
      $region13: #{actor_forward.1} parent=11 // pred_check
        %p206 = pneg %p60
      $region14: #{actor_forward.1} parent=11 // pred_check_branch
        %208 = sbr.rel (%p206) target = $region16
      $region15: #{actor_forward.1} parent=11 // pred_region
        _
      $region16: #{actor_forward.1} parent=11 // pred_fallthru
        _
      // Predicated region
      $region17: #{actor_forward.1} parent=11 // pred_check
        %p209 = pneg %p81
      $region18: #{actor_forward.1} parent=11 // pred_check_branch
        %211 = sbr.rel (%p209) target = $region20
      $region19: #{actor_forward.1} parent=11 // pred_region
        _
      $region20: #{actor_forward.1} parent=11 // pred_fallthru
        _
      // Predicated region
      $region21: #{actor_forward.1} parent=11 // pred_check
        %p212 = pneg %p102
      $region22: #{actor_forward.1} parent=11 // pred_check_branch
        %214 = sbr.rel (%p212) target = $region24
      $region23: #{actor_forward.1} parent=11 // pred_region
        _
      $region24: #{actor_forward.1} parent=11 // pred_fallthru
        _
      // Predicated region
      $region25: #{actor_forward.1} parent=11 // pred_check
        %p215 = pneg %p123
      $region26: #{actor_forward.1} parent=11 // pred_check_branch
        %217 = sbr.rel (%p215) target = $region28
      $region27: #{actor_forward.1} parent=11 // pred_region
        _
      $region28: #{actor_forward.1} parent=11 // pred_fallthru
        _
      // Predicated region
      $region29: #{actor_forward.1} parent=11 // pred_check
        %p218 = pneg %p144
      $region30: #{actor_forward.1} parent=11 // pred_check_branch
        %220 = sbr.rel (%p218) target = $region32
      $region31: #{actor_forward.1} parent=11 // pred_region
        _
      $region32: #{actor_forward.1} parent=11 // pred_fallthru
        _
      // Predicated region
      $region33: #{actor_forward.1} parent=11 // pred_check
        %p221 = pneg %p165
      $region34: #{actor_forward.1} parent=11 // pred_check_branch
        %223 = sbr.rel (%p221) target = $region36
      $region35: #{actor_forward.1} parent=11 // pred_region
        _
      $region36: #{actor_forward.1} parent=11 // pred_fallthru
        _
    $region12: #{actor_forward.1} parent=5 // pred_fallthru
      _
    %p224 = scmp.lt.s32.totalorder %s13, 2
    // Predicated region
    $region37: #{actor_forward.1} parent=5 // pred_check
      %p225 = pneg %p224
    $region38: #{actor_forward.1} parent=5 // pred_check_branch
      %227 = sbr.rel (%p225) target = $region40
    $region39: #{actor_forward.1} parent=5 // pred_region
      // Predicated region
      $region41: #{actor_forward.1} parent=39 // pred_check
        %p228 = pneg %p33
      $region42: #{actor_forward.1} parent=39 // pred_check_branch
        %230 = sbr.rel (%p228) target = $region44
      $region43: #{actor_forward.1} parent=39 // pred_region
        %s231 = smul.u32 32, %s13
        %p232 = scmp.lt.s32.totalorder %s231, 63
        %s233 = scalar_select %p232, %s231, 63
        %s234 = smul.addr %s233, 8
        %s235 = scalar_lea.vmem %s0, %s234
        %s236 = smul.u32 32, %s13
      $region44: #{actor_forward.1} parent=39 // pred_fallthru
        _
    $region40: #{actor_forward.1} parent=5 // pred_fallthru
      _
    %p237 = scmp.le.s32.totalorder 1, %s13
    %p238 = scmp.lt.s32.totalorder %s13, 3
    %p239 = pnand %p237, %p238
    %p240 = pneg %p239
    // Predicated region
    $region45: #{actor_forward.1} parent=5 // pred_check
      _
    $region46: #{actor_forward.1} parent=5 // pred_check_branch
      %242 = sbr.rel (%p239) target = $region48
    $region47: #{actor_forward.1} parent=5 // pred_region
      %s243 = ssub.s32 %s13, 1
      %s244 = smul.u32 32, %s18
      %p245 = scmp.lt.s32.totalorder %s244, 63
      %s246 = scalar_select %p245, %s244, 63
      %s247 = smul.addr %s246, 8
      %s248 = scalar_lea.vmem %s0, %s247
      %p249 = pneg %p39
      %p250 = pneg %p36
      %p251 = pneg %p60
      %p252 = pneg %p57
      %p253 = pneg %p81
      %p254 = pneg %p78
      %p255 = pneg %p102
      %p256 = pneg %p99
      %p257 = pneg %p123
      %p258 = pneg %p120
      %p259 = pneg %p144
      %p260 = pneg %p141
      %p261 = pneg %p165
      %p262 = pneg %p162
      %p263 = pneg %p191
      %p264 = pneg %p188
      %s265 = smul.u32 32, %s18
      %p266 = scmp.lt.s32.totalorder %s265, 63
      %s267 = scalar_select %p266, %s265, 63
      %s268 = smul.addr %s267, 8
      %s269 = scalar_lea.vmem %s7, %s268
      %s270 = smul.u32 32, %s18
      %p271 = scmp.lt.s32.totalorder %s270, 63
      %s272 = scalar_select %p271, %s270, 63
      %s273 = smul.addr %s272, 8
      %s274 = scalar_lea.vmem %s0, %s273
      %s275 = smul.u32 32, %s18
      %s276 = smul.u32 32, %s18
      %p277 = scmp.lt.s32.totalorder %s276, 63
      %s278 = scalar_select %p277, %s276, 63
      %s279 = smul.addr %s278, 8
      %s280 = scalar_lea.vmem %s7, %s279
      %s281 = smul.u32 32, %s18
      %v283 = vld [vmem:[%s274] sm:$0xff]
      %v284 = vld [vmem:[%s274 + $0x8] sm:$0xff]
      %v285 = vld [vmem:[%s274 + $0x10] sm:$0xff]
      %v286 = vld [vmem:[%s274 + $0x18] sm:$0xff]
      %v287 = vld [vmem:[%s274 + $0x20] sm:$0xff]
      %v288 = vld [vmem:[%s274 + $0x28] sm:$0xff]
      %v289 = vld [vmem:[%s274 + $0x30] sm:$0xff]
      %v290 = vld [vmem:[%s274 + $0x38] sm:$0xff]
      %v291 = vld [vmem:[%s274 + $0x40] sm:$0xff]
      %v292 = vld [vmem:[%s274 + $0x48] sm:$0xff]
      %v293 = vld [vmem:[%s274 + $0x50] sm:$0xff]
      %v294 = vld [vmem:[%s274 + $0x58] sm:$0xff]
      %v295 = vld [vmem:[%s274 + $0x60] sm:$0xff]
      %v296 = vld [vmem:[%s274 + $0x68] sm:$0xff]
      %v297 = vld [vmem:[%s274 + $0x70] sm:$0xff]
      %v298 = vld [vmem:[%s274 + $0x78] sm:$0xff]
      %v299 = vld [vmem:[%s274 + $0x80] sm:$0xff]
      %v300 = vld [vmem:[%s274 + $0x88] sm:$0xff]
      %v301 = vld [vmem:[%s274 + $0x90] sm:$0xff]
      %v302 = vld [vmem:[%s274 + $0x98] sm:$0xff]
      %v303 = vld [vmem:[%s274 + $0xa0] sm:$0xff]
      %v304 = vld [vmem:[%s274 + $0xa8] sm:$0xff]
      %v305 = vld [vmem:[%s274 + $0xb0] sm:$0xff]
      %v306 = vld [vmem:[%s274 + $0xb8] sm:$0xff]
      %v307 = vld [vmem:[%s274 + $0xc0] sm:$0xff]
      %v308 = vld [vmem:[%s274 + $0xc8] sm:$0xff]
      %v309 = vld [vmem:[%s274 + $0xd0] sm:$0xff]
      %v310 = vld [vmem:[%s274 + $0xd8] sm:$0xff]
      %v311 = vld [vmem:[%s274 + $0xe0] sm:$0xff]
      %v312 = vld [vmem:[%s274 + $0xe8] sm:$0xff]
      %v313 = vld [vmem:[%s274 + $0xf0] sm:$0xff]
      %v314 = vld [vmem:[%s274 + $0xf8] sm:$0xff]
      %v315 = vpack.c.bf16 %v284, %v283
      %v316 = vpack.c.bf16 %v286, %v285
      %v317 = vpack.c.bf16 %v288, %v287
      %v318 = vpack.c.bf16 %v290, %v289
      %v319 = vpack.c.bf16 %v292, %v291
      %v320 = vpack.c.bf16 %v294, %v293
      %v321 = vpack.c.bf16 %v296, %v295
      %v322 = vpack.c.bf16 %v298, %v297
      %v323 = vpack.c.bf16 %v300, %v299
      %v324 = vpack.c.bf16 %v302, %v301
      %v325 = vpack.c.bf16 %v304, %v303
      %v326 = vpack.c.bf16 %v306, %v305
      %v327 = vpack.c.bf16 %v308, %v307
      %v328 = vpack.c.bf16 %v310, %v309
      %v329 = vpack.c.bf16 %v312, %v311
      %v330 = vpack.c.bf16 %v314, %v313
      %v331 = vld [vmem:[%s1] sm:$0xf]
      %v332 = vld [vmem:[%s1 + $0x4] sm:$0xf]
      %v333 = vld [vmem:[%s2] sm:$0x1]
      %v335 = vperm.slane %v333, 0
      %v339 = vunpack.c.l.b16 %v331
      %v340 = vunpack.c.l.b16 %v332
      %v341 = vpack.c.b16 %v340, %v339
      %vm343 = vcmask 130048
      %v345 = vsel %vm343, %v315, 0
      %v348 = vsel %vm343, %v316, 0
      %v351 = vsel %vm343, %v317, 0
      %v354 = vsel %vm343, %v318, 0
      %v357 = vsel %vm343, %v319, 0
      %v360 = vsel %vm343, %v320, 0
      %v363 = vsel %vm343, %v321, 0
      %v366 = vsel %vm343, %v322, 0
      %v369 = vsel %vm343, %v323, 0
      %v372 = vsel %vm343, %v324, 0
      %v375 = vsel %vm343, %v325, 0
      %v378 = vsel %vm343, %v326, 0
      %v381 = vsel %vm343, %v327, 0
      %v384 = vsel %vm343, %v328, 0
      %v387 = vsel %vm343, %v329, 0
      %v390 = vsel %vm343, %v330, 0
      %392 = vmatpush.bf16.msra.mxu0 0
      %393 = vmatpush.bf16.msra.mxu0 0
      %394 = vmatpush.bf16.msra.mxu0 0
      %395 = vmatpush.bf16.msra.mxu0 0
      %396 = vmatpush.bf16.msra.mxu0 0
      %397 = vmatpush.bf16.msra.mxu0 0
      %398 = vmatpush.bf16.msra.mxu0 0
      %399 = vmatpush.bf16.msra.mxu0 %v341
      %400 = vmatmul.bf16.gmra.mxu0 %v345
      %v401 = vpop.f32.mrf.mxu0
      %v402 = vadd.f32 %v335, %v401
      %v403 = vpop.f32.mrf.mxu0
      %v404 = vadd.f32 %v335, %v403
      %405 = vmatmul.bf16.gmra.mxu0 %v348
      %v406 = vpop.f32.mrf.mxu0
      %v407 = vadd.f32 %v335, %v406
      %v408 = vpop.f32.mrf.mxu0
      %v409 = vadd.f32 %v335, %v408
      %410 = vmatmul.bf16.gmra.mxu0 %v351
      %v411 = vpop.f32.mrf.mxu0
      %v412 = vadd.f32 %v335, %v411
      %v413 = vpop.f32.mrf.mxu0
      %v414 = vadd.f32 %v335, %v413
      %415 = vmatmul.bf16.gmra.mxu0 %v354
      %v416 = vpop.f32.mrf.mxu0
      %v417 = vadd.f32 %v335, %v416
      %v418 = vpop.f32.mrf.mxu0
      %v419 = vadd.f32 %v335, %v418
      %420 = vmatmul.bf16.gmra.mxu0 %v357
      %v421 = vpop.f32.mrf.mxu0
      %v422 = vadd.f32 %v335, %v421
      %v423 = vpop.f32.mrf.mxu0
      %v424 = vadd.f32 %v335, %v423
      %425 = vmatmul.bf16.gmra.mxu0 %v360
      %v426 = vpop.f32.mrf.mxu0
      %v427 = vadd.f32 %v335, %v426
      %v428 = vpop.f32.mrf.mxu0
      %v429 = vadd.f32 %v335, %v428
      %430 = vmatmul.bf16.gmra.mxu0 %v363
      %v431 = vpop.f32.mrf.mxu0
      %v432 = vadd.f32 %v335, %v431
      %v433 = vpop.f32.mrf.mxu0
      %v434 = vadd.f32 %v335, %v433
      %435 = vmatmul.bf16.gmra.mxu0 %v366
      %v436 = vpop.f32.mrf.mxu0
      %v437 = vadd.f32 %v335, %v436
      %v438 = vpop.f32.mrf.mxu0
      %v439 = vadd.f32 %v335, %v438
      %440 = vmatmul.bf16.gmra.mxu0 %v369
      %v441 = vpop.f32.mrf.mxu0
      %v442 = vadd.f32 %v335, %v441
      %v443 = vpop.f32.mrf.mxu0
      %v444 = vadd.f32 %v335, %v443
      %445 = vmatmul.bf16.gmra.mxu0 %v372
      %v446 = vpop.f32.mrf.mxu0
      %v447 = vadd.f32 %v335, %v446
      %v448 = vpop.f32.mrf.mxu0
      %v449 = vadd.f32 %v335, %v448
      %450 = vmatmul.bf16.gmra.mxu0 %v375
      %v451 = vpop.f32.mrf.mxu0
      %v452 = vadd.f32 %v335, %v451
      %v453 = vpop.f32.mrf.mxu0
      %v454 = vadd.f32 %v335, %v453
      %455 = vmatmul.bf16.gmra.mxu0 %v378
      %v456 = vpop.f32.mrf.mxu0
      %v457 = vadd.f32 %v335, %v456
      %v458 = vpop.f32.mrf.mxu0
      %v459 = vadd.f32 %v335, %v458
      %460 = vmatmul.bf16.gmra.mxu0 %v381
      %v461 = vpop.f32.mrf.mxu0
      %v462 = vadd.f32 %v335, %v461
      %v463 = vpop.f32.mrf.mxu0
      %v464 = vadd.f32 %v335, %v463
      %465 = vmatmul.bf16.gmra.mxu0 %v384
      %v466 = vpop.f32.mrf.mxu0
      %v467 = vadd.f32 %v335, %v466
      %v468 = vpop.f32.mrf.mxu0
      %v469 = vadd.f32 %v335, %v468
      %470 = vmatmul.bf16.gmra.mxu0 %v387
      %v471 = vpop.f32.mrf.mxu0
      %v472 = vadd.f32 %v335, %v471
      %v473 = vpop.f32.mrf.mxu0
      %v474 = vadd.f32 %v335, %v473
      %475 = vmatmul.bf16.gmra.mxu0 %v390
      %v476 = vpop.f32.mrf.mxu0
      %v477 = vadd.f32 %v335, %v476
      %v478 = vpop.f32.mrf.mxu0
      %v479 = vadd.f32 %v335, %v478
      %480 = vdwg.mxu0
      %v481 = vtanh.pop %v402
      %v482 = vtanh.pop %v404
      %v483 = vtanh.pop %v407
      %v484 = vtanh.pop %v409
      %v485 = vtanh.pop %v412
      %v486 = vtanh.pop %v414
      %v487 = vtanh.pop %v417
      %v488 = vtanh.pop %v419
      %v489 = vtanh.pop %v422
      %v490 = vtanh.pop %v424
      %v491 = vtanh.pop %v427
      %v492 = vtanh.pop %v429
      %v493 = vtanh.pop %v432
      %v494 = vtanh.pop %v434
      %v495 = vtanh.pop %v437
      %v496 = vtanh.pop %v439
      %v497 = vtanh.pop %v442
      %v498 = vtanh.pop %v444
      %v499 = vtanh.pop %v447
      %v500 = vtanh.pop %v449
      %v501 = vtanh.pop %v452
      %v502 = vtanh.pop %v454
      %v503 = vtanh.pop %v457
      %v504 = vtanh.pop %v459
      %v505 = vtanh.pop %v462
      %v506 = vtanh.pop %v464
      %v507 = vtanh.pop %v467
      %v508 = vtanh.pop %v469
      %v509 = vtanh.pop %v472
      %v510 = vtanh.pop %v474
      %v511 = vtanh.pop %v477
      %v512 = vtanh.pop %v479
      %v513 = vpack.c.bf16 %v482, %v481
      %v514 = vpack.c.bf16 %v484, %v483
      %v515 = vpack.c.bf16 %v486, %v485
      %v516 = vpack.c.bf16 %v488, %v487
      %v517 = vpack.c.bf16 %v490, %v489
      %v518 = vpack.c.bf16 %v492, %v491
      %v519 = vpack.c.bf16 %v494, %v493
      %v520 = vpack.c.bf16 %v496, %v495
      %v521 = vpack.c.bf16 %v498, %v497
      %v522 = vpack.c.bf16 %v500, %v499
      %v523 = vpack.c.bf16 %v502, %v501
      %v524 = vpack.c.bf16 %v504, %v503
      %v525 = vpack.c.bf16 %v506, %v505
      %v526 = vpack.c.bf16 %v508, %v507
      %v527 = vpack.c.bf16 %v510, %v509
      %v528 = vpack.c.bf16 %v512, %v511
      %v529 = vld [vmem:[%s3] sm:$0xf]
      %v530 = vld [vmem:[%s3 + $0x4] sm:$0xf]
      %v531 = vld [vmem:[%s3 + $0x8] sm:$0xf]
      %v532 = vld [vmem:[%s3 + $0xc] sm:$0xf]
      %v533 = vld [vmem:[%s3 + $0x10] sm:$0xf]
      %v534 = vld [vmem:[%s3 + $0x14] sm:$0xf]
      %v535 = vld [vmem:[%s3 + $0x18] sm:$0xf]
      %v536 = vld [vmem:[%s3 + $0x1c] sm:$0xf]
      %v537 = vld [vmem:[%s3 + $0x20] sm:$0xf]
      %v538 = vld [vmem:[%s3 + $0x24] sm:$0xf]
      %v539 = vld [vmem:[%s3 + $0x28] sm:$0xf]
      %v540 = vld [vmem:[%s3 + $0x2c] sm:$0xf]
      %v541 = vld [vmem:[%s3 + $0x30] sm:$0xf]
      %v542 = vld [vmem:[%s3 + $0x34] sm:$0xf]
      %v543 = vld [vmem:[%s3 + $0x38] sm:$0xf]
      %v544 = vld [vmem:[%s3 + $0x3c] sm:$0xf]
      %v545 = vld [vmem:[%s4] sm:$0x1]
      %v547 = vperm.slane %v545, 0
      %v565 = vunpack.c.l.b16 %v529
      %v566 = vunpack.c.l.b16 %v530
      %v567 = vunpack.c.l.b16 %v531
      %v568 = vunpack.c.l.b16 %v532
      %v569 = vunpack.c.l.b16 %v533
      %v570 = vunpack.c.l.b16 %v534
      %v571 = vunpack.c.l.b16 %v535
      %v572 = vunpack.c.l.b16 %v536
      %v573 = vunpack.c.l.b16 %v537
      %v574 = vunpack.c.l.b16 %v538
      %v575 = vunpack.c.l.b16 %v539
      %v576 = vunpack.c.l.b16 %v540
      %v577 = vunpack.c.l.b16 %v541
      %v578 = vunpack.c.l.b16 %v542
      %v579 = vunpack.c.l.b16 %v543
      %v580 = vunpack.c.l.b16 %v544
      %v581 = vpack.c.b16 %v566, %v565
      %v582 = vpack.c.b16 %v568, %v567
      %v583 = vpack.c.b16 %v570, %v569
      %v584 = vpack.c.b16 %v572, %v571
      %v585 = vpack.c.b16 %v574, %v573
      %v586 = vpack.c.b16 %v576, %v575
      %v587 = vpack.c.b16 %v578, %v577
      %v588 = vpack.c.b16 %v580, %v579
      %597 = vmatpush.bf16.msra.mxu0 %v588
      %598 = vmatpush.bf16.msra.mxu0 %v587
      %599 = vmatpush.bf16.msra.mxu0 %v586
      %600 = vmatpush.bf16.msra.mxu0 %v585
      %601 = vmatpush.bf16.msra.mxu0 %v584
      %602 = vmatpush.bf16.msra.mxu0 %v583
      %603 = vmatpush.bf16.msra.mxu0 %v582
      %604 = vmatpush.bf16.msra.mxu0 %v581
      %605 = vmatmul.bf16.gmra.mxu0 %v513
      %v606 = vpop.f32.mrf.mxu0
      %v607 = vadd.f32 %v547, %v606
      %v608 = vpop.f32.mrf.mxu0
      %v609 = vadd.f32 %v547, %v608
      %610 = vmatmul.bf16.gmra.mxu0 %v514
      %v611 = vpop.f32.mrf.mxu0
      %v612 = vadd.f32 %v547, %v611
      %v613 = vpop.f32.mrf.mxu0
      %v614 = vadd.f32 %v547, %v613
      %615 = vmatmul.bf16.gmra.mxu0 %v515
      %v616 = vpop.f32.mrf.mxu0
      %v617 = vadd.f32 %v547, %v616
      %v618 = vpop.f32.mrf.mxu0
      %v619 = vadd.f32 %v547, %v618
      %620 = vmatmul.bf16.gmra.mxu0 %v516
      %v621 = vpop.f32.mrf.mxu0
      %v622 = vadd.f32 %v547, %v621
      %v623 = vpop.f32.mrf.mxu0
      %v624 = vadd.f32 %v547, %v623
      %625 = vmatmul.bf16.gmra.mxu0 %v517
      %v626 = vpop.f32.mrf.mxu0
      %v627 = vadd.f32 %v547, %v626
      %v628 = vpop.f32.mrf.mxu0
      %v629 = vadd.f32 %v547, %v628
      %630 = vmatmul.bf16.gmra.mxu0 %v518
      %v631 = vpop.f32.mrf.mxu0
      %v632 = vadd.f32 %v547, %v631
      %v633 = vpop.f32.mrf.mxu0
      %v634 = vadd.f32 %v547, %v633
      %635 = vmatmul.bf16.gmra.mxu0 %v519
      %v636 = vpop.f32.mrf.mxu0
      %v637 = vadd.f32 %v547, %v636
      %v638 = vpop.f32.mrf.mxu0
      %v639 = vadd.f32 %v547, %v638
      %640 = vmatmul.bf16.gmra.mxu0 %v520
      %v641 = vpop.f32.mrf.mxu0
      %v642 = vadd.f32 %v547, %v641
      %v643 = vpop.f32.mrf.mxu0
      %v644 = vadd.f32 %v547, %v643
      %645 = vmatmul.bf16.gmra.mxu0 %v521
      %v646 = vpop.f32.mrf.mxu0
      %v647 = vadd.f32 %v547, %v646
      %v648 = vpop.f32.mrf.mxu0
      %v649 = vadd.f32 %v547, %v648
      %650 = vmatmul.bf16.gmra.mxu0 %v522
      %v651 = vpop.f32.mrf.mxu0
      %v652 = vadd.f32 %v547, %v651
      %v653 = vpop.f32.mrf.mxu0
      %v654 = vadd.f32 %v547, %v653
      %655 = vmatmul.bf16.gmra.mxu0 %v523
      %v656 = vpop.f32.mrf.mxu0
      %v657 = vadd.f32 %v547, %v656
      %v658 = vpop.f32.mrf.mxu0
      %v659 = vadd.f32 %v547, %v658
      %660 = vmatmul.bf16.gmra.mxu0 %v524
      %v661 = vpop.f32.mrf.mxu0
      %v662 = vadd.f32 %v547, %v661
      %v663 = vpop.f32.mrf.mxu0
      %v664 = vadd.f32 %v547, %v663
      %665 = vmatmul.bf16.gmra.mxu0 %v525
      %v666 = vpop.f32.mrf.mxu0
      %v667 = vadd.f32 %v547, %v666
      %v668 = vpop.f32.mrf.mxu0
      %v669 = vadd.f32 %v547, %v668
      %670 = vmatmul.bf16.gmra.mxu0 %v526
      %v671 = vpop.f32.mrf.mxu0
      %v672 = vadd.f32 %v547, %v671
      %v673 = vpop.f32.mrf.mxu0
      %v674 = vadd.f32 %v547, %v673
      %675 = vmatmul.bf16.gmra.mxu0 %v527
      %v676 = vpop.f32.mrf.mxu0
      %v677 = vadd.f32 %v547, %v676
      %v678 = vpop.f32.mrf.mxu0
      %v679 = vadd.f32 %v547, %v678
      %680 = vmatmul.bf16.gmra.mxu0 %v528
      %v681 = vpop.f32.mrf.mxu0
      %v682 = vadd.f32 %v547, %v681
      %v683 = vpop.f32.mrf.mxu0
      %v684 = vadd.f32 %v547, %v683
      %685 = vdwg.mxu0
      %v686 = vtanh.pop %v607
      %v687 = vtanh.pop %v609
      %v688 = vtanh.pop %v612
      %v689 = vtanh.pop %v614
      %v690 = vtanh.pop %v617
      %v691 = vtanh.pop %v619
      %v692 = vtanh.pop %v622
      %v693 = vtanh.pop %v624
      %v694 = vtanh.pop %v627
      %v695 = vtanh.pop %v629
      %v696 = vtanh.pop %v632
      %v697 = vtanh.pop %v634
      %v698 = vtanh.pop %v637
      %v699 = vtanh.pop %v639
      %v700 = vtanh.pop %v642
      %v701 = vtanh.pop %v644
      %v702 = vtanh.pop %v647
      %v703 = vtanh.pop %v649
      %v704 = vtanh.pop %v652
      %v705 = vtanh.pop %v654
      %v706 = vtanh.pop %v657
      %v707 = vtanh.pop %v659
      %v708 = vtanh.pop %v662
      %v709 = vtanh.pop %v664
      %v710 = vtanh.pop %v667
      %v711 = vtanh.pop %v669
      %v712 = vtanh.pop %v672
      %v713 = vtanh.pop %v674
      %v714 = vtanh.pop %v677
      %v715 = vtanh.pop %v679
      %v716 = vtanh.pop %v682
      %v717 = vtanh.pop %v684
      %v718 = vpack.c.bf16 %v687, %v686
      %v719 = vpack.c.bf16 %v689, %v688
      %v720 = vpack.c.bf16 %v691, %v690
      %v721 = vpack.c.bf16 %v693, %v692
      %v722 = vpack.c.bf16 %v695, %v694
      %v723 = vpack.c.bf16 %v697, %v696
      %v724 = vpack.c.bf16 %v699, %v698
      %v725 = vpack.c.bf16 %v701, %v700
      %v726 = vpack.c.bf16 %v703, %v702
      %v727 = vpack.c.bf16 %v705, %v704
      %v728 = vpack.c.bf16 %v707, %v706
      %v729 = vpack.c.bf16 %v709, %v708
      %v730 = vpack.c.bf16 %v711, %v710
      %v731 = vpack.c.bf16 %v713, %v712
      %v732 = vpack.c.bf16 %v715, %v714
      %v733 = vpack.c.bf16 %v717, %v716
      %v734 = vld [vmem:[%s5] sm:$0xf]
      %v735 = vld [vmem:[%s5 + $0x4] sm:$0xf]
      %v736 = vld [vmem:[%s5 + $0x8] sm:$0xf]
      %v737 = vld [vmem:[%s5 + $0xc] sm:$0xf]
      %v738 = vld [vmem:[%s5 + $0x10] sm:$0xf]
      %v739 = vld [vmem:[%s5 + $0x14] sm:$0xf]
      %v740 = vld [vmem:[%s5 + $0x18] sm:$0xf]
      %v741 = vld [vmem:[%s5 + $0x1c] sm:$0xf]
      %v742 = vld [vmem:[%s5 + $0x20] sm:$0xf]
      %v743 = vld [vmem:[%s5 + $0x24] sm:$0xf]
      %v744 = vld [vmem:[%s5 + $0x28] sm:$0xf]
      %v745 = vld [vmem:[%s5 + $0x2c] sm:$0xf]
      %v746 = vld [vmem:[%s5 + $0x30] sm:$0xf]
      %v747 = vld [vmem:[%s5 + $0x34] sm:$0xf]
      %v748 = vld [vmem:[%s5 + $0x38] sm:$0xf]
      %v749 = vld [vmem:[%s5 + $0x3c] sm:$0xf]
      %v750 = vld [vmem:[%s6] sm:$0x1]
      %v752 = vperm.slane %v750, 0
      %v770 = vunpack.c.l.b16 %v734
      %v771 = vunpack.c.l.b16 %v735
      %v772 = vunpack.c.l.b16 %v736
      %v773 = vunpack.c.l.b16 %v737
      %v774 = vunpack.c.l.b16 %v738
      %v775 = vunpack.c.l.b16 %v739
      %v776 = vunpack.c.l.b16 %v740
      %v777 = vunpack.c.l.b16 %v741
      %v778 = vunpack.c.l.b16 %v742
      %v779 = vunpack.c.l.b16 %v743
      %v780 = vunpack.c.l.b16 %v744
      %v781 = vunpack.c.l.b16 %v745
      %v782 = vunpack.c.l.b16 %v746
      %v783 = vunpack.c.l.b16 %v747
      %v784 = vunpack.c.l.b16 %v748
      %v785 = vunpack.c.l.b16 %v749
      %v786 = vpack.c.b16 %v771, %v770
      %v787 = vpack.c.b16 %v773, %v772
      %v788 = vpack.c.b16 %v775, %v774
      %v789 = vpack.c.b16 %v777, %v776
      %v790 = vpack.c.b16 %v779, %v778
      %v791 = vpack.c.b16 %v781, %v780
      %v792 = vpack.c.b16 %v783, %v782
      %v793 = vpack.c.b16 %v785, %v784
      %802 = vmatpush.bf16.msra.mxu0 %v793
      %803 = vmatpush.bf16.msra.mxu0 %v792
      %804 = vmatpush.bf16.msra.mxu0 %v791
      %805 = vmatpush.bf16.msra.mxu0 %v790
      %806 = vmatpush.bf16.msra.mxu0 %v789
      %807 = vmatpush.bf16.msra.mxu0 %v788
      %808 = vmatpush.bf16.msra.mxu0 %v787
      %809 = vmatpush.bf16.msra.mxu0 %v786
      %810 = vmatmul.bf16.gmra.mxu0 %v718
      %v811 = vpop.f32.mrf.mxu0
      %v812 = vadd.f32 %v752, %v811
      %v813 = vpop.f32.mrf.mxu0
      %v814 = vadd.f32 %v752, %v813
      %815 = vmatmul.bf16.gmra.mxu0 %v719
      %v816 = vpop.f32.mrf.mxu0
      %v817 = vadd.f32 %v752, %v816
      %v818 = vpop.f32.mrf.mxu0
      %v819 = vadd.f32 %v752, %v818
      %820 = vmatmul.bf16.gmra.mxu0 %v720
      %v821 = vpop.f32.mrf.mxu0
      %v822 = vadd.f32 %v752, %v821
      %v823 = vpop.f32.mrf.mxu0
      %v824 = vadd.f32 %v752, %v823
      %825 = vmatmul.bf16.gmra.mxu0 %v721
      %v826 = vpop.f32.mrf.mxu0
      %v827 = vadd.f32 %v752, %v826
      %v828 = vpop.f32.mrf.mxu0
      %v829 = vadd.f32 %v752, %v828
      %830 = vmatmul.bf16.gmra.mxu0 %v722
      %v831 = vpop.f32.mrf.mxu0
      %v832 = vadd.f32 %v752, %v831
      %v833 = vpop.f32.mrf.mxu0
      %v834 = vadd.f32 %v752, %v833
      %835 = vmatmul.bf16.gmra.mxu0 %v723
      %v836 = vpop.f32.mrf.mxu0
      %v837 = vadd.f32 %v752, %v836
      %v838 = vpop.f32.mrf.mxu0
      %v839 = vadd.f32 %v752, %v838
      %840 = vmatmul.bf16.gmra.mxu0 %v724
      %v841 = vpop.f32.mrf.mxu0
      %v842 = vadd.f32 %v752, %v841
      %v843 = vpop.f32.mrf.mxu0
      %v844 = vadd.f32 %v752, %v843
      %845 = vmatmul.bf16.gmra.mxu0 %v725
      %v846 = vpop.f32.mrf.mxu0
      %v847 = vadd.f32 %v752, %v846
      %v848 = vpop.f32.mrf.mxu0
      %v849 = vadd.f32 %v752, %v848
      %850 = vmatmul.bf16.gmra.mxu0 %v726
      %v851 = vpop.f32.mrf.mxu0
      %v852 = vadd.f32 %v752, %v851
      %v853 = vpop.f32.mrf.mxu0
      %v854 = vadd.f32 %v752, %v853
      %855 = vmatmul.bf16.gmra.mxu0 %v727
      %v856 = vpop.f32.mrf.mxu0
      %v857 = vadd.f32 %v752, %v856
      %v858 = vpop.f32.mrf.mxu0
      %v859 = vadd.f32 %v752, %v858
      %860 = vmatmul.bf16.gmra.mxu0 %v728
      %v861 = vpop.f32.mrf.mxu0
      %v862 = vadd.f32 %v752, %v861
      %v863 = vpop.f32.mrf.mxu0
      %v864 = vadd.f32 %v752, %v863
      %865 = vmatmul.bf16.gmra.mxu0 %v729
      %v866 = vpop.f32.mrf.mxu0
      %v867 = vadd.f32 %v752, %v866
      %v868 = vpop.f32.mrf.mxu0
      %v869 = vadd.f32 %v752, %v868
      %870 = vmatmul.bf16.gmra.mxu0 %v730
      %v871 = vpop.f32.mrf.mxu0
      %v872 = vadd.f32 %v752, %v871
      %v873 = vpop.f32.mrf.mxu0
      %v874 = vadd.f32 %v752, %v873
      %875 = vmatmul.bf16.gmra.mxu0 %v731
      %v876 = vpop.f32.mrf.mxu0
      %v877 = vadd.f32 %v752, %v876
      %v878 = vpop.f32.mrf.mxu0
      %v879 = vadd.f32 %v752, %v878
      %880 = vmatmul.bf16.gmra.mxu0 %v732
      %v881 = vpop.f32.mrf.mxu0
      %v882 = vadd.f32 %v752, %v881
      %v883 = vpop.f32.mrf.mxu0
      %v884 = vadd.f32 %v752, %v883
      %885 = vmatmul.bf16.gmra.mxu0 %v733
      %v886 = vpop.f32.mrf.mxu0
      %v887 = vadd.f32 %v752, %v886
      %v888 = vpop.f32.mrf.mxu0
      %v889 = vadd.f32 %v752, %v888
      %890 = vdwg.mxu0
      %891 = vst [vmem:[%s280] sm:$0xff] %v812
      %892 = vst [vmem:[%s280 + $0x8] sm:$0xff] %v814
      %893 = vst [vmem:[%s280 + $0x10] sm:$0xff] %v817
      %894 = vst [vmem:[%s280 + $0x18] sm:$0xff] %v819
      %895 = vst [vmem:[%s280 + $0x20] sm:$0xff] %v822
      %896 = vst [vmem:[%s280 + $0x28] sm:$0xff] %v824
      %897 = vst [vmem:[%s280 + $0x30] sm:$0xff] %v827
      %898 = vst [vmem:[%s280 + $0x38] sm:$0xff] %v829
      %899 = vst [vmem:[%s280 + $0x40] sm:$0xff] %v832
      %900 = vst [vmem:[%s280 + $0x48] sm:$0xff] %v834
      %901 = vst [vmem:[%s280 + $0x50] sm:$0xff] %v837
      %902 = vst [vmem:[%s280 + $0x58] sm:$0xff] %v839
      %903 = vst [vmem:[%s280 + $0x60] sm:$0xff] %v842
      %904 = vst [vmem:[%s280 + $0x68] sm:$0xff] %v844
      %905 = vst [vmem:[%s280 + $0x70] sm:$0xff] %v847
      %906 = vst [vmem:[%s280 + $0x78] sm:$0xff] %v849
      %907 = vst [vmem:[%s280 + $0x80] sm:$0xff] %v852
      %908 = vst [vmem:[%s280 + $0x88] sm:$0xff] %v854
      %909 = vst [vmem:[%s280 + $0x90] sm:$0xff] %v857
      %910 = vst [vmem:[%s280 + $0x98] sm:$0xff] %v859
      %911 = vst [vmem:[%s280 + $0xa0] sm:$0xff] %v862
      %912 = vst [vmem:[%s280 + $0xa8] sm:$0xff] %v864
      %913 = vst [vmem:[%s280 + $0xb0] sm:$0xff] %v867
      %914 = vst [vmem:[%s280 + $0xb8] sm:$0xff] %v869
      %915 = vst [vmem:[%s280 + $0xc0] sm:$0xff] %v872
      %916 = vst [vmem:[%s280 + $0xc8] sm:$0xff] %v874
      %917 = vst [vmem:[%s280 + $0xd0] sm:$0xff] %v877
      %918 = vst [vmem:[%s280 + $0xd8] sm:$0xff] %v879
      %919 = vst [vmem:[%s280 + $0xe0] sm:$0xff] %v882
      %920 = vst [vmem:[%s280 + $0xe8] sm:$0xff] %v884
      %921 = vst [vmem:[%s280 + $0xf0] sm:$0xff] %v887
      %922 = vst [vmem:[%s280 + $0xf8] sm:$0xff] %v889
      %s923 = smul.u32 32, %s18
      %p924 = scmp.lt.s32.totalorder %s923, 63
      %s925 = scalar_select %p924, %s923, 63
      %s926 = smul.addr %s925, 8
      %s927 = scalar_lea.vmem %s7, %s926
      // Predicated region
      $region49: #{actor_forward.1} parent=47 // pred_check
        %p928 = pneg %p188
      $region50: #{actor_forward.1} parent=47 // pred_check_branch
        %930 = sbr.rel (%p928) target = $region52
      $region51: #{actor_forward.1} parent=47 // pred_region
        %s931 = smul.u32 32, %s18
      $region52: #{actor_forward.1} parent=47 // pred_fallthru
        _
    $region48: #{actor_forward.1} parent=5 // pred_fallthru
      _
    %p932 = scmp.le.s32.totalorder 2, %s13
    // Predicated region
    $region53: #{actor_forward.1} parent=5 // pred_check
      %p933 = pneg %p932
    $region54: #{actor_forward.1} parent=5 // pred_check_branch
      %935 = sbr.rel (%p933) target = $region56
    $region55: #{actor_forward.1} parent=5 // pred_region
      %s936 = ssub.s32 %s13, 2
      // Predicated region
      $region57: #{actor_forward.1} parent=55 // pred_check
        %p937 = pneg %p194
      $region58: #{actor_forward.1} parent=55 // pred_check_branch
        %939 = sbr.rel (%p937) target = $region60
      $region59: #{actor_forward.1} parent=55 // pred_region
        %s940 = smul.u32 32, %s19
        %p941 = scmp.lt.s32.totalorder %s940, 63
        %s942 = scalar_select %p941, %s940, 63
        %s943 = smul.addr %s942, 8
        %s944 = scalar_lea.vmem %s7, %s943
      $region60: #{actor_forward.1} parent=55 // pred_fallthru
        _
    $region56: #{actor_forward.1} parent=5 // pred_fallthru
      _
  $region6: #{actor_forward.1} parent=0 // loop_footer
    %s17 = sadd.s32 1, %s13
  $region7: #{actor_forward.1} parent=0 // loop_footer_branch
    %12 = sbr.rel target = $region3
  $region8: #{actor_forward.1} parent=0 // loop_exit
    _

</llo_original>
